<compile_context>
chip_gen: v7x
topology: tpu7x:2x2x1
jax: 0.10.0
libtpu: 0.0.40
codegen_flags: <defaults>
</compile_context>

<pallas_src>
import functools

import jax
import jax.numpy as jnp
from jax.experimental import pallas as pl
from jax.experimental.pallas import tpu as pltpu

BN_EPS = 1e-5
LANE = 128


def _round_up(n, m):
    return (n + m - 1) // m * m


def _pad2(a, rows, cols, fill=0.0):
    return jnp.pad(a, ((0, rows - a.shape[0]), (0, cols - a.shape[1])),
                   constant_values=fill)


def _cparams(resident_bytes, semantics=None):
    """CompilerParams with an explicit scoped-VMEM budget (+headroom)."""
    limit = int(min(max(resident_bytes * 2, 32 << 20), 64 << 20))
    if semantics is None:
        return pltpu.CompilerParams(vmem_limit_bytes=limit)
    return pltpu.CompilerParams(dimension_semantics=semantics,
                                vmem_limit_bytes=limit)


# --------------------------------------------------------------------------
# Parameter preparation — runs ONCE, outside the per-call path.
# --------------------------------------------------------------------------
def prepare_params(params):
    """Pad to lane multiples, cast weights to bf16, pack BN vectors. Call once."""
    input_size, hidden = params["w1"].shape
    hidden2 = params["w2"].shape[1]
    out_size = params["w4"].shape[1]
    ip, hp, h2p, op = (_round_up(d, LANE)
                       for d in (input_size, hidden, hidden2, out_size))

    w1 = _pad2(params["w1"], ip, hp).astype(jnp.bfloat16)
    w2 = _pad2(params["w2"], hp, h2p).astype(jnp.bfloat16)
    w3 = _pad2(params["w3"], h2p, hp).astype(jnp.bfloat16)
    w4 = _pad2(params["w4"], hp, op).astype(jnp.bfloat16)

    # b1..b3 intentionally dropped (BatchNorm mean subtraction cancels them).
    g1 = _pad2(params["g1"], 1, hp, 1.0)
    be1 = _pad2(params["beta1"], 1, hp)
    g2 = _pad2(params["g2"], 1, h2p, 1.0)
    be2 = _pad2(params["beta2"], 1, h2p)
    g3 = _pad2(params["g3"], 1, hp, 1.0)
    be3 = _pad2(params["beta3"], 1, hp)
    b4 = _pad2(params["b4"], 1, op)

    # Packed per-feature operand for the fused small-batch kernel (1 DMA).
    vec = jnp.concatenate([g1, be1, g2, be2, g3, be3, b4], axis=1)

    return dict(w1=w1, w2=w2, w3=w3, w4=w4, vec=vec,
                g1=g1, be1=be1, g2=g2, be2=be2, g3=g3, be3=be3, b4=b4)


# --------------------------------------------------------------------------
# Fused small-batch kernel (everything VMEM-resident, no grid).
# --------------------------------------------------------------------------
def _make_fused_kernel(seg_bounds):
    g1b, be1b, g2b, be2b, g3b, be3b, b4b = seg_bounds

    def kernel(x_ref, w1_ref, w2_ref, w3_ref, w4_ref, vec_ref, o_ref):
        def seg(b):
            lo, hi = b
            return vec_ref[:, lo:hi]              # static lane-aligned view

        def bn_relu(h, g_b, beta_b):               # all f32 elementwise math
            mean = jnp.mean(h, axis=0, keepdims=True)
            d = h - mean
            var = jnp.mean(d * d, axis=0, keepdims=True)
            scale = seg(g_b) * jax.lax.rsqrt(var + BN_EPS)   # rsqrt -> EUP
            return jnp.maximum(d * scale + seg(beta_b), 0.0)

        h = bn_relu(jnp.dot(x_ref[...], w1_ref[...],
                            preferred_element_type=jnp.float32), g1b, be1b)
        h = bn_relu(jnp.dot(h.astype(jnp.bfloat16), w2_ref[...],
                            preferred_element_type=jnp.float32), g2b, be2b)
        h = bn_relu(jnp.dot(h.astype(jnp.bfloat16), w3_ref[...],
                            preferred_element_type=jnp.float32), g3b, be3b)
        out = jnp.dot(h.astype(jnp.bfloat16), w4_ref[...],
                      preferred_element_type=jnp.float32) + seg(b4b)
        o_ref[...] = out.astype(o_ref.dtype)

    return kernel


def _forward_fused(x, prep, out_size):
    B = x.shape[0]
    ip, hp = prep["w1"].shape
    h2p = prep["w2"].shape[1]
    op = prep["w4"].shape[1]

    x_p = _pad2(x, B, ip).astype(jnp.bfloat16)

    widths = (hp, hp, h2p, h2p, hp, hp, op)
    bounds, lo = [], 0
    for w in widths:
        bounds.append((lo, lo + w))
        lo += w

    wbytes = 2 * (ip * hp + hp * h2p + h2p * hp + hp * op)     # bf16 weights
    flops = 2 * B * (ip * hp + hp * h2p + h2p * hp + hp * op) + 8 * B * (2 * hp + h2p)
    bytes_accessed = 2 * B * ip + wbytes + 4 * prep["vec"].shape[1] + 4 * B * op
    need = bytes_accessed + 4 * B * (2 * hp + h2p)             # + f32 intermediates

    vmem = pl.BlockSpec(memory_space=pltpu.MemorySpace.VMEM)
    out_p = pl.pallas_call(
        _make_fused_kernel(tuple(bounds)),
        out_shape=jax.ShapeDtypeStruct((B, op), jnp.float32),
        in_specs=[vmem] * 6,
        out_specs=vmem,
        cost_estimate=pl.CostEstimate(flops=int(flops),
                                      transcendentals=int(2 * hp + h2p),
                                      bytes_accessed=int(bytes_accessed)),
        compiler_params=_cparams(need),
    )(x_p, prep["w1"], prep["w2"], prep["w3"], prep["w4"], prep["vec"])
    return out_p[:, :out_size]


# --------------------------------------------------------------------------
# Batch-tiled two-phase-BatchNorm path.
# --------------------------------------------------------------------------
def _accumulate_stats(y, step, psum_ref, psq_ref, sum_out_ref, sq_out_ref):
    """VALU-only partial sum / sum-of-squares into an (8, F) scratch; one
    cross-sublane (XLU) reduce at the last grid step."""
    tm, f = y.shape
    part = jnp.zeros((8, f), jnp.float32)
    partsq = jnp.zeros((8, f), jnp.float32)
    for j in range(tm // 8):                       # static, sublane-aligned views
        blk = y[j * 8:(j + 1) * 8, :]
        part = part + blk
        partsq = partsq + blk * blk

    @pl.when(step == 0)
    def _():
        psum_ref[...] = jnp.zeros_like(psum_ref)
        psq_ref[...] = jnp.zeros_like(psq_ref)

    psum_ref[...] += part
    psq_ref[...] += partsq

    @pl.when(step == pl.num_programs(0) - 1)
    def _():
        sum_out_ref[...] = jnp.sum(psum_ref[...], axis=0, keepdims=True)
        sq_out_ref[...] = jnp.sum(psq_ref[...], axis=0, keepdims=True)


def _matmul_stats_kernel(x_ref, w_ref, y_ref, sum_ref, sq_ref, psum_ref, psq_ref):
    i = pl.program_id(0)
    y = jnp.dot(x_ref[...], w_ref[...], preferred_element_type=jnp.float32)
    y_ref[...] = y
    _accumulate_stats(y, i, psum_ref, psq_ref, sum_ref, sq_ref)


def _make_bn_matmul_stats_kernel(batch_true, batch_padded):
    inv_n = 1.0 / float(batch_true)
    need_mask = batch_padded > batch_true

    def kernel(h_ref, sum_ref, sq_ref, g_ref, be_ref, w_ref,
               y_ref, sum_o_ref, sq_o_ref, psum_ref, psq_ref):
        i = pl.program_id(0)
        h = h_ref[...]
        mean = sum_ref[...] * inv_n
        var = jnp.maximum(sq_ref[...] * inv_n - mean * mean, 0.0)
        scale = g_ref[...] * jax.lax.rsqrt(var + BN_EPS)        # rsqrt -> EUP
        a = jnp.maximum((h - mean) * scale + be_ref[...], 0.0)  # fused BN+ReLU (f32)
        if need_mask:
            tm = h.shape[0]
            rows = i * tm + jax.lax.broadcasted_iota(jnp.int32, (tm, 1), 0)
            a = jnp.where(rows < batch_true, a, 0.0)            # keep pad rows exactly 0
        y = jnp.dot(a.astype(jnp.bfloat16), w_ref[...],
                    preferred_element_type=jnp.float32)
        y_ref[...] = y
        _accumulate_stats(y, i, psum_ref, psq_ref, sum_o_ref, sq_o_ref)

    return kernel


def _make_bn_matmul_bias_kernel(batch_true):
    inv_n = 1.0 / float(batch_true)

    def kernel(h_ref, sum_ref, sq_ref, g_ref, be_ref, w_ref, b_ref, o_ref):
        h = h_ref[...]
        mean = sum_ref[...] * inv_n
        var = jnp.maximum(sq_ref[...] * inv_n - mean * mean, 0.0)
        scale = g_ref[...] * jax.lax.rsqrt(var + BN_EPS)
        a = jnp.maximum((h - mean) * scale + be_ref[...], 0.0)
        o_ref[...] = (jnp.dot(a.astype(jnp.bfloat16), w_ref[...],
                              preferred_element_type=jnp.float32) + b_ref[...])

    return kernel


def _forward_tiled(x, prep, out_size, tm):
    assert tm % 8 == 0, "batch tile must be a multiple of 8 sublanes"
    B = x.shape[0]
    ip, hp = prep["w1"].shape
    h2p = prep["w2"].shape[1]
    op = prep["w4"].shape[1]

    Bp = _round_up(B, tm)
    n_tiles = Bp // tm
    x_p = _pad2(x, Bp, ip).astype(jnp.bfloat16)

    def tile(c):
        return pl.BlockSpec((tm, c), lambda i: (i, 0))

    def whole(r, c):
        return pl.BlockSpec((r, c), lambda i: (0, 0))   # resident (DMA'd once)

    wbytes = 2 * max(ip * hp, hp * h2p, h2p * hp, hp * op)
    tbytes = 4 * tm * max(ip, hp, h2p, op)
    cp_arb = _cparams(wbytes + 8 * tbytes, ("arbitrary",))
    cp_par = _cparams(wbytes + 8 * tbytes, ("parallel",))

    def stats_outs(f):
        return ((jax.ShapeDtypeStruct((Bp, f), jnp.float32),
                 jax.ShapeDtypeStruct((1, f), jnp.float32),
                 jax.ShapeDtypeStruct((1, f), jnp.float32)),
                (tile(f), whole(1, f), whole(1, f)),
                [pltpu.VMEM((8, f), jnp.float32), pltpu.VMEM((8, f), jnp.float32)])

    # ---- layer 1: h1 = x @ W1, accumulate BN1 stats ----
    oshape, ospec, scratch = stats_outs(hp)
    h1, s1, q1 = pl.pallas_call(
        _matmul_stats_kernel, grid=(n_tiles,),
        in_specs=[tile(ip), whole(ip, hp)],
        out_shape=oshape, out_specs=ospec, scratch_shapes=scratch,
        compiler_params=cp_arb,
        cost_estimate=pl.CostEstimate(
            flops=int(2 * Bp * ip * hp + 4 * Bp * hp), transcendentals=0,
            bytes_accessed=int(2 * Bp * ip + 2 * ip * hp + 4 * Bp * hp)),
    )(x_p, prep["w1"])

    kmid = _make_bn_matmul_stats_kernel(B, Bp)

    # ---- layer 2: relu(bn1(h1)) @ W2, accumulate BN2 stats ----
    oshape, ospec, scratch = stats_outs(h2p)
    h2, s2, q2 = pl.pallas_call(
        kmid, grid=(n_tiles,),
        in_specs=[tile(hp), whole(1, hp), whole(1, hp), whole(1, hp), whole(1, hp),
                  whole(hp, h2p)],
        out_shape=oshape, out_specs=ospec, scratch_shapes=scratch,
        compiler_params=cp_arb,
        cost_estimate=pl.CostEstimate(
            flops=int(2 * Bp * hp * h2p + 10 * Bp * hp), transcendentals=int(hp),
            bytes_accessed=int(4 * Bp * hp + 2 * hp * h2p + 4 * Bp * h2p)),
    )(h1, s1, q1, prep["g1"], prep["be1"], prep["w2"])

    # ---- layer 3: relu(bn2(h2)) @ W3, accumulate BN3 stats ----
    oshape, ospec, scratch = stats_outs(hp)
    h3, s3, q3 = pl.pallas_call(
        kmid, grid=(n_tiles,),
        in_specs=[tile(h2p), whole(1, h2p), whole(1, h2p), whole(1, h2p), whole(1, h2p),
                  whole(h2p, hp)],
        out_shape=oshape, out_specs=ospec, scratch_shapes=scratch,
        compiler_params=cp_arb,
        cost_estimate=pl.CostEstimate(
            flops=int(2 * Bp * h2p * hp + 10 * Bp * h2p), transcendentals=int(h2p),
            bytes_accessed=int(4 * Bp * h2p + 2 * h2p * hp + 4 * Bp * hp)),
    )(h2, s2, q2, prep["g2"], prep["be2"], prep["w3"])

    # ---- layer 4: relu(bn3(h3)) @ W4 + b4 (no stats -> tiles independent) ----
    out_p = pl.pallas_call(
        _make_bn_matmul_bias_kernel(B), grid=(n_tiles,),
        in_specs=[tile(hp), whole(1, hp), whole(1, hp), whole(1, hp), whole(1, hp),
                  whole(hp, op), whole(1, op)],
        out_shape=jax.ShapeDtypeStruct((Bp, op), jnp.float32),
        out_specs=tile(op),
        compiler_params=cp_par,
        cost_estimate=pl.CostEstimate(
            flops=int(2 * Bp * hp * op + 10 * Bp * hp), transcendentals=int(hp),
            bytes_accessed=int(4 * Bp * hp + 2 * hp * op + 4 * Bp * op)),
    )(h3, s3, q3, prep["g3"], prep["be3"], prep["w4"], prep["b4"])

    return out_p[:B, :out_size]


# --------------------------------------------------------------------------
# Public forward.
# --------------------------------------------------------------------------
@functools.partial(jax.jit, static_argnames=("out_size", "tile_batch"))
def protein_structure_predictor(x, prep, *, out_size, tile_batch=None):
    """prep: output of prepare_params (padded/packed/bf16, built once at init)."""
    B = x.shape[0]
    ip, hp = prep["w1"].shape
    h2p = prep["w2"].shape[1]
    op = prep["w4"].shape[1]

    # Static path selection: fully fused single call while everything (incl. f32
    # intermediates) fits comfortably in the smallest per-generation scoped VMEM.
    fused_bytes = (B * ip * 2 + B * (2 * hp + h2p + op) * 4
                   + 2 * (prep["w1"].size + prep["w2"].size
                          + prep["w3"].size + prep["w4"].size)
                   + 4 * prep["vec"].size)
    if tile_batch is None and fused_bytes <= (10 << 20):
        return _forward_fused(x, prep, out_size)

    tm = 256 if tile_batch is None else int(tile_batch)   # 256: fills v6e/v7x MXU rows
    return _forward_tiled(x, prep, out_size, tm)


# --------------------------------------------------------------------------
# Deterministic synthetic parameters + pure-JAX reference (PyTorch semantics).
# --------------------------------------------------------------------------
def init_params(key, input_size, hidden_size, output_size):
    ks = jax.random.split(key, 8)

    def lin(kw, kb, fin, fout):
        w = jax.random.normal(kw, (fin, fout), jnp.float32) * (1.0 / jnp.sqrt(fin))
        b = jax.random.normal(kb, (1, fout), jnp.float32) * 0.01
        return w, b

    w1, b1 = lin(ks[0], ks[1], input_size, hidden_size)
    w2, b2 = lin(ks[2], ks[3], hidden_size, hidden_size * 2)
    w3, b3 = lin(ks[4], ks[5], hidden_size * 2, hidden_size)
    w4, b4 = lin(ks[6], ks[7], hidden_size, output_size)

    def bn(f):
        return jnp.ones((1, f), jnp.float32), jnp.zeros((1, f), jnp.float32)

    g1, beta1 = bn(hidden_size)
    g2, beta2 = bn(hidden_size * 2)
    g3, beta3 = bn(hidden_size)

    return dict(w1=w1, b1=b1, g1=g1, beta1=beta1,
                w2=w2, b2=b2, g2=g2, beta2=beta2,
                w3=w3, b3=b3, g3=g3, beta3=beta3,
                w4=w4, b4=b4)


def reference_forward(x, p):
    """f32 reference mirroring the PyTorch training-mode forward (keeps b1..b3)."""
    def bn_relu(h, g, beta):
        m = jnp.mean(h, axis=0, keepdims=True)
        v = jnp.mean((h - m) ** 2, axis=0, keepdims=True)
        return jnp.maximum((h - m) / jnp.sqrt(v + BN_EPS) * g + beta, 0.0)

    h = bn_relu(x @ p["w1"] + p["b1"], p["g1"], p["beta1"])
    h = bn_relu(h @ p["w2"] + p["b2"], p["g2"], p["beta2"])
    h = bn_relu(h @ p["w3"] + p["b3"], p["g3"], p["beta3"])
    return h @ p["w4"] + p["b4"]


if __name__ == "__main__":
    input_size, hidden_size, output_size = 16, 32, 8
    key = jax.random.PRNGKey(0)
    kx, kp, kx2 = jax.random.split(key, 3)

    params = init_params(kp, input_size, hidden_size, output_size)
    prep = prepare_params(params)      # one-time pad/pack/bf16 (hoisted out of call path)

    # 1) Small batch -> single fused VMEM-resident kernel.
    batch = 8
    x = jax.random.normal(kx, (batch, input_size), jnp.float32)
    out = jax.block_until_ready(
        protein_structure_predictor(x, prep, out_size=output_size))
    ref = reference_forward(x, params)
    assert out.shape == (batch, output_size)
    # bf16 MXU operands (f32 accumulation / f32 BN stats) -> loose tolerance vs f32 ref.
    assert jnp.allclose(out, ref, atol=5e-2, rtol=5e-2), "fused path mismatch"

    # 2) Batch-tiled two-phase-BN path; batch not a multiple of the tile exercises
    #    the padded-row masking and multi-tile stats accumulation.
    batch2 = 200
    x2 = jax.random.normal(kx2, (batch2, input_size), jnp.float32)
    out2 = jax.block_until_ready(
        protein_structure_predictor(x2, prep, out_size=output_size, tile_batch=128))
    ref2 = reference_forward(x2, params)
    assert out2.shape == (batch2, output_size)
    assert jnp.allclose(out2, ref2, atol=5e-2, rtol=5e-2), "tiled path mismatch"

    print("KERNEL_OK")
</pallas_src>

<mosaic_0001>
module attributes {stable_mosaic.version = 11 : i64} {
  func.func @kernel(%arg0: memref<8x128xbf16, #tpu.memory_space<vmem>>, %arg1: memref<128x128xbf16, #tpu.memory_space<vmem>>, %arg2: memref<128x128xbf16, #tpu.memory_space<vmem>>, %arg3: memref<128x128xbf16, #tpu.memory_space<vmem>>, %arg4: memref<128x128xbf16, #tpu.memory_space<vmem>>, %arg5: memref<1x896xf32, #tpu.memory_space<vmem>>, %arg6: memref<8x128xf32, #tpu.memory_space<vmem>>) attributes {dimension_semantics = [], scalar_prefetch = 0 : i64, scratch_operands = 0 : i64, tpu.core_type = #tpu.core_type<tc>} {
    %c0 = arith.constant 0 : index
    %c0_0 = arith.constant 0 : index
    %0 = vector.load %arg0[%c0, %c0_0] : memref<8x128xbf16, #tpu.memory_space<vmem>>, vector<8x128xbf16>
    %c0_1 = arith.constant 0 : index
    %c0_2 = arith.constant 0 : index
    %1 = vector.load %arg1[%c0_1, %c0_2] : memref<128x128xbf16, #tpu.memory_space<vmem>>, vector<128x128xbf16>
    %cst = arith.constant dense<0.000000e+00> : vector<8x128xf32>
    %2 = tpu.matmul %0, %1, %cst {dimension_numbers = #tpu.dot_dimension_numbers<[1], [0], [0], [1], [0, 0, 1, 1], [], []>} : vector<8x128xbf16>, vector<128x128xbf16>, vector<8x128xf32> -> vector<8x128xf32>
    %cst_3 = arith.constant dense<0.000000e+00> : vector<128xf32>
    %3 = vector.multi_reduction <add>, %2, %cst_3 [0] : vector<8x128xf32> to vector<128xf32>
    %4 = vector.shape_cast %3 : vector<128xf32> to vector<1x128xf32>
    %cst_4 = arith.constant 8.000000e+00 : f32
    %5 = vector.broadcast %cst_4 : f32 to vector<1x128xf32>
    %6 = arith.divf %4, %5 : vector<1x128xf32>
    %7 = vector.broadcast %6 : vector<1x128xf32> to vector<8x128xf32>
    %8 = arith.subf %2, %7 : vector<8x128xf32>
    %9 = arith.mulf %8, %8 : vector<8x128xf32>
    %cst_5 = arith.constant dense<0.000000e+00> : vector<128xf32>
    %10 = vector.multi_reduction <add>, %9, %cst_5 [0] : vector<8x128xf32> to vector<128xf32>
    %11 = vector.shape_cast %10 : vector<128xf32> to vector<1x128xf32>
    %cst_6 = arith.constant 8.000000e+00 : f32
    %12 = vector.broadcast %cst_6 : f32 to vector<1x128xf32>
    %13 = arith.divf %11, %12 : vector<1x128xf32>
    %c0_7 = arith.constant 0 : index
    %c0_8 = arith.constant 0 : index
    %14 = vector.load %arg5[%c0_7, %c0_8] : memref<1x896xf32, #tpu.memory_space<vmem>>, vector<1x128xf32>
    %cst_9 = arith.constant 9.99999974E-6 : f32
    %15 = vector.broadcast %cst_9 : f32 to vector<1x128xf32>
    %16 = arith.addf %13, %15 : vector<1x128xf32>
    %17 = math.rsqrt %16 : vector<1x128xf32>
    %18 = arith.mulf %14, %17 : vector<1x128xf32>
    %19 = vector.broadcast %18 : vector<1x128xf32> to vector<8x128xf32>
    %20 = arith.mulf %8, %19 : vector<8x128xf32>
    %c0_10 = arith.constant 0 : index
    %c128 = arith.constant 128 : index
    %21 = vector.load %arg5[%c0_10, %c128] : memref<1x896xf32, #tpu.memory_space<vmem>>, vector<1x128xf32>
    %22 = vector.broadcast %21 : vector<1x128xf32> to vector<8x128xf32>
    %23 = arith.addf %20, %22 : vector<8x128xf32>
    %cst_11 = arith.constant 0.000000e+00 : f32
    %24 = vector.broadcast %cst_11 : f32 to vector<8x128xf32>
    %25 = arith.maximumf %23, %24 : vector<8x128xf32>
    %26 = arith.truncf %25 : vector<8x128xf32> to vector<8x128xbf16>
    %c0_12 = arith.constant 0 : index
    %c0_13 = arith.constant 0 : index
    %27 = vector.load %arg2[%c0_12, %c0_13] : memref<128x128xbf16, #tpu.memory_space<vmem>>, vector<128x128xbf16>
    %cst_14 = arith.constant dense<0.000000e+00> : vector<8x128xf32>
    %28 = tpu.matmul %26, %27, %cst_14 {dimension_numbers = #tpu.dot_dimension_numbers<[1], [0], [0], [1], [0, 0, 1, 1], [], []>} : vector<8x128xbf16>, vector<128x128xbf16>, vector<8x128xf32> -> vector<8x128xf32>
    %cst_15 = arith.constant dense<0.000000e+00> : vector<128xf32>
    %29 = vector.multi_reduction <add>, %28, %cst_15 [0] : vector<8x128xf32> to vector<128xf32>
    %30 = vector.shape_cast %29 : vector<128xf32> to vector<1x128xf32>
    %cst_16 = arith.constant 8.000000e+00 : f32
    %31 = vector.broadcast %cst_16 : f32 to vector<1x128xf32>
    %32 = arith.divf %30, %31 : vector<1x128xf32>
    %33 = vector.broadcast %32 : vector<1x128xf32> to vector<8x128xf32>
    %34 = arith.subf %28, %33 : vector<8x128xf32>
    %35 = arith.mulf %34, %34 : vector<8x128xf32>
    %cst_17 = arith.constant dense<0.000000e+00> : vector<128xf32>
    %36 = vector.multi_reduction <add>, %35, %cst_17 [0] : vector<8x128xf32> to vector<128xf32>
    %37 = vector.shape_cast %36 : vector<128xf32> to vector<1x128xf32>
    %cst_18 = arith.constant 8.000000e+00 : f32
    %38 = vector.broadcast %cst_18 : f32 to vector<1x128xf32>
    %39 = arith.divf %37, %38 : vector<1x128xf32>
    %c0_19 = arith.constant 0 : index
    %c256 = arith.constant 256 : index
    %40 = vector.load %arg5[%c0_19, %c256] : memref<1x896xf32, #tpu.memory_space<vmem>>, vector<1x128xf32>
    %cst_20 = arith.constant 9.99999974E-6 : f32
    %41 = vector.broadcast %cst_20 : f32 to vector<1x128xf32>
    %42 = arith.addf %39, %41 : vector<1x128xf32>
    %43 = math.rsqrt %42 : vector<1x128xf32>
    %44 = arith.mulf %40, %43 : vector<1x128xf32>
    %45 = vector.broadcast %44 : vector<1x128xf32> to vector<8x128xf32>
    %46 = arith.mulf %34, %45 : vector<8x128xf32>
    %c0_21 = arith.constant 0 : index
    %c384 = arith.constant 384 : index
    %47 = vector.load %arg5[%c0_21, %c384] : memref<1x896xf32, #tpu.memory_space<vmem>>, vector<1x128xf32>
    %48 = vector.broadcast %47 : vector<1x128xf32> to vector<8x128xf32>
    %49 = arith.addf %46, %48 : vector<8x128xf32>
    %cst_22 = arith.constant 0.000000e+00 : f32
    %50 = vector.broadcast %cst_22 : f32 to vector<8x128xf32>
    %51 = arith.maximumf %49, %50 : vector<8x128xf32>
    %52 = arith.truncf %51 : vector<8x128xf32> to vector<8x128xbf16>
    %c0_23 = arith.constant 0 : index
    %c0_24 = arith.constant 0 : index
    %53 = vector.load %arg3[%c0_23, %c0_24] : memref<128x128xbf16, #tpu.memory_space<vmem>>, vector<128x128xbf16>
    %cst_25 = arith.constant dense<0.000000e+00> : vector<8x128xf32>
    %54 = tpu.matmul %52, %53, %cst_25 {dimension_numbers = #tpu.dot_dimension_numbers<[1], [0], [0], [1], [0, 0, 1, 1], [], []>} : vector<8x128xbf16>, vector<128x128xbf16>, vector<8x128xf32> -> vector<8x128xf32>
    %cst_26 = arith.constant dense<0.000000e+00> : vector<128xf32>
    %55 = vector.multi_reduction <add>, %54, %cst_26 [0] : vector<8x128xf32> to vector<128xf32>
    %56 = vector.shape_cast %55 : vector<128xf32> to vector<1x128xf32>
    %cst_27 = arith.constant 8.000000e+00 : f32
    %57 = vector.broadcast %cst_27 : f32 to vector<1x128xf32>
    %58 = arith.divf %56, %57 : vector<1x128xf32>
    %59 = vector.broadcast %58 : vector<1x128xf32> to vector<8x128xf32>
    %60 = arith.subf %54, %59 : vector<8x128xf32>
    %61 = arith.mulf %60, %60 : vector<8x128xf32>
    %cst_28 = arith.constant dense<0.000000e+00> : vector<128xf32>
    %62 = vector.multi_reduction <add>, %61, %cst_28 [0] : vector<8x128xf32> to vector<128xf32>
    %63 = vector.shape_cast %62 : vector<128xf32> to vector<1x128xf32>
    %cst_29 = arith.constant 8.000000e+00 : f32
    %64 = vector.broadcast %cst_29 : f32 to vector<1x128xf32>
    %65 = arith.divf %63, %64 : vector<1x128xf32>
    %c0_30 = arith.constant 0 : index
    %c512 = arith.constant 512 : index
    %66 = vector.load %arg5[%c0_30, %c512] : memref<1x896xf32, #tpu.memory_space<vmem>>, vector<1x128xf32>
    %cst_31 = arith.constant 9.99999974E-6 : f32
    %67 = vector.broadcast %cst_31 : f32 to vector<1x128xf32>
    %68 = arith.addf %65, %67 : vector<1x128xf32>
    %69 = math.rsqrt %68 : vector<1x128xf32>
    %70 = arith.mulf %66, %69 : vector<1x128xf32>
    %71 = vector.broadcast %70 : vector<1x128xf32> to vector<8x128xf32>
    %72 = arith.mulf %60, %71 : vector<8x128xf32>
    %c0_32 = arith.constant 0 : index
    %c640 = arith.constant 640 : index
    %73 = vector.load %arg5[%c0_32, %c640] : memref<1x896xf32, #tpu.memory_space<vmem>>, vector<1x128xf32>
    %74 = vector.broadcast %73 : vector<1x128xf32> to vector<8x128xf32>
    %75 = arith.addf %72, %74 : vector<8x128xf32>
    %cst_33 = arith.constant 0.000000e+00 : f32
    %76 = vector.broadcast %cst_33 : f32 to vector<8x128xf32>
    %77 = arith.maximumf %75, %76 : vector<8x128xf32>
    %78 = arith.truncf %77 : vector<8x128xf32> to vector<8x128xbf16>
    %c0_34 = arith.constant 0 : index
    %c0_35 = arith.constant 0 : index
    %79 = vector.load %arg4[%c0_34, %c0_35] : memref<128x128xbf16, #tpu.memory_space<vmem>>, vector<128x128xbf16>
    %cst_36 = arith.constant dense<0.000000e+00> : vector<8x128xf32>
    %80 = tpu.matmul %78, %79, %cst_36 {dimension_numbers = #tpu.dot_dimension_numbers<[1], [0], [0], [1], [0, 0, 1, 1], [], []>} : vector<8x128xbf16>, vector<128x128xbf16>, vector<8x128xf32> -> vector<8x128xf32>
    %c0_37 = arith.constant 0 : index
    %c768 = arith.constant 768 : index
    %81 = vector.load %arg5[%c0_37, %c768] : memref<1x896xf32, #tpu.memory_space<vmem>>, vector<1x128xf32>
    %82 = vector.broadcast %81 : vector<1x128xf32> to vector<8x128xf32>
    %83 = arith.addf %80, %82 : vector<8x128xf32>
    %c0_38 = arith.constant 0 : index
    %c0_39 = arith.constant 0 : index
    %84 = vector.load %arg6[%c0_38, %c0_39] : memref<8x128xf32, #tpu.memory_space<vmem>>, vector<8x128xf32>
    tpu.vector_store %arg6[%c0_38, %c0_39], %83 {strides = array<i32>} : memref<8x128xf32, #tpu.memory_space<vmem>>, vector<8x128xf32>,
    return
  }
}

</mosaic_0001>

<llo_original>
// kernel: protein_structure_predictor.1
$region0: #{protein_structure_predictor.1}
  #allocation0 [shape = 'u32[]', space=smem, size = 0x4, offset = 0x4, fixed_abs, tag = 'smem constant byte address 0x4 - core index']
  #allocation1 [shape = 'u32[144,128]{1,0:T(1,128)}', space=vmem, size = 0x12000, scoped, tag = 'internal scratch']
  %s0 = inlined_call_operand.vmem [shape: bf16[8,128], index: 0, kind: input, shape index: {}]
  %s1 = inlined_call_operand.hbm [shape: bf16[128,128], index: 1, kind: input, shape index: {}]
  %s2 = inlined_call_operand.hbm [shape: bf16[128,128], index: 2, kind: input, shape index: {}]
  %s3 = inlined_call_operand.hbm [shape: bf16[128,128], index: 3, kind: input, shape index: {}]
  %s4 = inlined_call_operand.hbm [shape: bf16[128,128], index: 4, kind: input, shape index: {}]
  %s5 = inlined_call_operand.vmem [shape: f32[1,896], index: 5, kind: input, shape index: {}]
  %s6 = inlined_call_operand.hbm [shape: f32[8,128], index: 6, kind: output, shape index: {}]
  %s7 = sld [smem:[#allocation0]]
  $region50: #{protein_structure_predictor.1} parent=0
    _
  %s9 = ssub.s32 1, %s7
  %s10 = scalar_select 0, %s9, %s7
  $region1: #{protein_structure_predictor.1} parent=0
    #allocation2 [shape = 'u8[32768]{0}', space=vmem, size = 0x8000, scoped, tag = 'input window, operand 1, single buffered']
    #allocation3 [shape = 's32[1]{0}', space=sflag, size = 0x4, scoped, tag = 'scoped memory for protein_structure_predictor.1']
    #allocation4 [shape = 's32[1]{0}', space=sflag, size = 0x4, scoped, tag = 'scoped memory for protein_structure_predictor.1']
    #allocation5 [shape = 'u8[32768]{0}', space=vmem, size = 0x8000, scoped, tag = 'input window, operand 2, single buffered']
    #allocation6 [shape = 's32[1]{0}', space=sflag, size = 0x4, scoped, tag = 'scoped memory for protein_structure_predictor.1']
    #allocation7 [shape = 'u8[32768]{0}', space=vmem, size = 0x8000, scoped, tag = 'input window, operand 3, single buffered']
    #allocation8 [shape = 'u8[32768]{0}', space=vmem, size = 0x8000, scoped, tag = 'input window, operand 4, single buffered']
    #allocation9 [shape = 's32[1]{0}', space=sflag, size = 0x4, scoped, tag = 'scoped memory for protein_structure_predictor.1']
    #allocation10 [shape = 'u8[4096]{0}', space=vmem, size = 0x1000, scoped, tag = 'output window, operand 0, single buffered']
    %11 = vsyncpa [#allocation3], 0
    %12 = vsyncpa [#allocation6], 0
    %13 = vsyncpa [#allocation9], 0
    %14 = vsyncpa [#allocation4], 0
    // Predicated region
    $region2: #{protein_structure_predictor.1} parent=1 // pred_check
      _
    $region3: #{protein_structure_predictor.1} parent=1 // pred_check_branch
      %16 = sbr.rel (0) target = $region5
    $region4: #{protein_structure_predictor.1} parent=1 // pred_region
      _
    $region5: #{protein_structure_predictor.1} parent=1 // pred_fallthru
      _
    // Predicated region
    $region6: #{protein_structure_predictor.1} parent=1 // pred_check
      _
    $region7: #{protein_structure_predictor.1} parent=1 // pred_check_branch
      %18 = sbr.rel (0) target = $region9
    $region8: #{protein_structure_predictor.1} parent=1 // pred_region
      %s20 = ssub.s32 1024, 1024
      %21 = vsyncadd [#allocation3], %s20
      %s22 = sshll.u32 [#allocation2], 4
      %s23 = int_to_ptr.vmem [resolvable:$true] %s22
      %28 = dma.hbm_to_vmem [thread:$0]  %s1, 1024, %s23, [#allocation3], 64, 64, 4
    $region9: #{protein_structure_predictor.1} parent=1 // pred_fallthru
      _
    // Predicated region
    $region10: #{protein_structure_predictor.1} parent=1 // pred_check
      _
    $region11: #{protein_structure_predictor.1} parent=1 // pred_check_branch
      %30 = sbr.rel (0) target = $region13
    $region12: #{protein_structure_predictor.1} parent=1 // pred_region
      %s32 = ssub.s32 1024, 1024
      %33 = vsyncadd [#allocation6], %s32
      %s34 = sshll.u32 [#allocation5], 4
      %s35 = int_to_ptr.vmem [resolvable:$true] %s34
      %40 = dma.hbm_to_vmem [thread:$0]  %s2, 1024, %s35, [#allocation6], 64, 64, 4
    $region13: #{protein_structure_predictor.1} parent=1 // pred_fallthru
      _
    // Predicated region
    $region14: #{protein_structure_predictor.1} parent=1 // pred_check
      _
    $region15: #{protein_structure_predictor.1} parent=1 // pred_check_branch
      %42 = sbr.rel (0) target = $region17
    $region16: #{protein_structure_predictor.1} parent=1 // pred_region
      %s44 = ssub.s32 1024, 1024
      %45 = vsyncadd [#allocation6], %s44
      %s46 = sshll.u32 [#allocation7], 4
      %s47 = int_to_ptr.vmem [resolvable:$true] %s46
      %52 = dma.hbm_to_vmem [thread:$0]  %s3, 1024, %s47, [#allocation6], 64, 64, 4
    $region17: #{protein_structure_predictor.1} parent=1 // pred_fallthru
      _
    // Predicated region
    $region18: #{protein_structure_predictor.1} parent=1 // pred_check
      _
    $region19: #{protein_structure_predictor.1} parent=1 // pred_check_branch
      %54 = sbr.rel (0) target = $region21
    $region20: #{protein_structure_predictor.1} parent=1 // pred_region
      %s56 = ssub.s32 1024, 1024
      %57 = vsyncadd [#allocation9], %s56
      %s58 = sshll.u32 [#allocation8], 4
      %s59 = int_to_ptr.vmem [resolvable:$true] %s58
      %64 = dma.hbm_to_vmem [thread:$0]  %s4, 1024, %s59, [#allocation9], 64, 64, 4
    $region21: #{protein_structure_predictor.1} parent=1 // pred_fallthru
      _
    // Predicated region
    $region22: #{protein_structure_predictor.1} parent=1 // pred_check
      _
    $region23: #{protein_structure_predictor.1} parent=1 // pred_check_branch
      %66 = sbr.rel (0) target = $region25
    $region24: #{protein_structure_predictor.1} parent=1 // pred_region
      _
    $region25: #{protein_structure_predictor.1} parent=1 // pred_fallthru
      _
    // Predicated region
    $region26: #{protein_structure_predictor.1} parent=1 // pred_check
      _
    $region27: #{protein_structure_predictor.1} parent=1 // pred_check_branch
      %68 = sbr.rel (0) target = $region29
    $region28: #{protein_structure_predictor.1} parent=1 // pred_region
      %69 = dma.done [#allocation3], 1024
    $region29: #{protein_structure_predictor.1} parent=1 // pred_fallthru
      _
    // Predicated region
    $region30: #{protein_structure_predictor.1} parent=1 // pred_check
      _
    $region31: #{protein_structure_predictor.1} parent=1 // pred_check_branch
      %71 = sbr.rel (0) target = $region33
    $region32: #{protein_structure_predictor.1} parent=1 // pred_region
      %72 = dma.done [#allocation6], 1024
    $region33: #{protein_structure_predictor.1} parent=1 // pred_fallthru
      _
    // Predicated region
    $region34: #{protein_structure_predictor.1} parent=1 // pred_check
      _
    $region35: #{protein_structure_predictor.1} parent=1 // pred_check_branch
      %74 = sbr.rel (0) target = $region37
    $region36: #{protein_structure_predictor.1} parent=1 // pred_region
      %75 = dma.done [#allocation6], 1024
    $region37: #{protein_structure_predictor.1} parent=1 // pred_fallthru
      _
    // Predicated region
    $region38: #{protein_structure_predictor.1} parent=1 // pred_check
      _
    $region39: #{protein_structure_predictor.1} parent=1 // pred_check_branch
      %77 = sbr.rel (0) target = $region41
    $region40: #{protein_structure_predictor.1} parent=1 // pred_region
      %78 = dma.done [#allocation9], 1024
    $region41: #{protein_structure_predictor.1} parent=1 // pred_fallthru
      _
    %v80 = vld [vmem:[%s0] sm:$0xf]
    %v81 = vld [vmem:[#allocation2] sm:$0xf]
    %v82 = vld [vmem:[#allocation2 + $0x4] sm:$0xf]
    %v83 = vld [vmem:[#allocation2 + $0x8] sm:$0xf]
    %v84 = vld [vmem:[#allocation2 + $0xc] sm:$0xf]
    %v85 = vld [vmem:[#allocation2 + $0x10] sm:$0xf]
    %v86 = vld [vmem:[#allocation2 + $0x14] sm:$0xf]
    %v87 = vld [vmem:[#allocation2 + $0x18] sm:$0xf]
    %v88 = vld [vmem:[#allocation2 + $0x1c] sm:$0xf]
    %v89 = vld [vmem:[#allocation2 + $0x20] sm:$0xf]
    %v90 = vld [vmem:[#allocation2 + $0x24] sm:$0xf]
    %v91 = vld [vmem:[#allocation2 + $0x28] sm:$0xf]
    %v92 = vld [vmem:[#allocation2 + $0x2c] sm:$0xf]
    %v93 = vld [vmem:[#allocation2 + $0x30] sm:$0xf]
    %v94 = vld [vmem:[#allocation2 + $0x34] sm:$0xf]
    %v95 = vld [vmem:[#allocation2 + $0x38] sm:$0xf]
    %v96 = vld [vmem:[#allocation2 + $0x3c] sm:$0xf]
    %v113 = vunpack.c.l.b16 %v81
    %v114 = vunpack.c.l.b16 %v82
    %v115 = vunpack.c.l.b16 %v83
    %v116 = vunpack.c.l.b16 %v84
    %v117 = vunpack.c.l.b16 %v85
    %v118 = vunpack.c.l.b16 %v86
    %v119 = vunpack.c.l.b16 %v87
    %v120 = vunpack.c.l.b16 %v88
    %v121 = vunpack.c.l.b16 %v89
    %v122 = vunpack.c.l.b16 %v90
    %v123 = vunpack.c.l.b16 %v91
    %v124 = vunpack.c.l.b16 %v92
    %v125 = vunpack.c.l.b16 %v93
    %v126 = vunpack.c.l.b16 %v94
    %v127 = vunpack.c.l.b16 %v95
    %v128 = vunpack.c.l.b16 %v96
    %v129 = vpack.c.b16 %v114, %v113
    %v130 = vpack.c.b16 %v116, %v115
    %v131 = vpack.c.b16 %v118, %v117
    %v132 = vpack.c.b16 %v120, %v119
    %v133 = vpack.c.b16 %v122, %v121
    %v134 = vpack.c.b16 %v124, %v123
    %v135 = vpack.c.b16 %v126, %v125
    %v136 = vpack.c.b16 %v128, %v127
    %145 = vmatprep.subr.bf16.mxu0 0
    %146 = vmatpush1.bf16.msra.mxu0 %v129
    %147 = vmatprep.subr.bf16.mxu0 0
    %148 = vmatpush1.bf16.msra.mxu0 %v130
    %149 = vmatprep.subr.bf16.mxu0 0
    %150 = vmatpush1.bf16.msra.mxu0 %v131
    %151 = vmatprep.subr.bf16.mxu0 0
    %152 = vmatpush1.bf16.msra.mxu0 %v132
    %153 = vmatprep.subr.bf16.mxu0 0
    %154 = vmatpush1.bf16.msra.mxu0 %v133
    %155 = vmatprep.subr.bf16.mxu0 0
    %156 = vmatpush1.bf16.msra.mxu0 %v134
    %157 = vmatprep.subr.bf16.mxu0 0
    %158 = vmatpush1.bf16.msra.mxu0 %v135
    %159 = vmatprep.subr.bf16.mxu0 0
    %160 = vmatpush1.bf16.msra.mxu0 %v136
    %161 = vmatprep.subr.bf16.mxu0 0
    %162 = vmatpush1.bf16.msra.mxu0 0
    %163 = vmatprep.subr.bf16.mxu0 0
    %164 = vmatpush1.bf16.msra.mxu0 0
    %165 = vmatprep.subr.bf16.mxu0 0
    %166 = vmatpush1.bf16.msra.mxu0 0
    %167 = vmatprep.subr.bf16.mxu0 0
    %168 = vmatpush1.bf16.msra.mxu0 0
    %169 = vmatprep.subr.bf16.mxu0 0
    %170 = vmatpush1.bf16.msra.mxu0 0
    %171 = vmatprep.subr.bf16.mxu0 0
    %172 = vmatpush1.bf16.msra.mxu0 0
    %173 = vmatprep.subr.bf16.mxu0 0
    %174 = vmatpush1.bf16.msra.mxu0 0
    %175 = vmatprep.subr.bf16.mxu0 0
    %176 = vmatpush1.bf16.msra.mxu0 0
    %177 = vmatprep.mubr.bf16.mxu0 0
    %178 = vmatmul.mubr.bf16.gmra.mrb[0].mxu0 %v80
    %v179 = vpop.f32.mrb[0].mxu0
    %v180 = vadd.f32 0.0, %v179
    %v181 = vpop.f32.mrb[0].mxu0
    %v182 = vpop.f32.mrb[0].mxu0
    %v183 = vpop.f32.mrb[0].mxu0
    %184 = vdwg.mxu0
    %v185 = vrot.slane %v180, 4
    %v186 = vadd.f32 %v180, %v185
    %v187 = vrot.slane %v186, 2
    %v188 = vadd.f32 %v186, %v187
    %v189 = vrot.slane %v188, 1
    %v190 = vadd.f32 %v188, %v189
    %v191 = vrcp.pop 8.0
    %v192 = vmul.f32 %v190, %v191
    %v193 = vsub.f32 %v180, %v192
    %v194 = vmul.f32 %v193, %v193
    %v195 = vrot.slane %v194, 4
    %v196 = vadd.f32 %v194, %v195
    %v197 = vrot.slane %v196, 2
    %v198 = vadd.f32 %v196, %v197
    %v199 = vrot.slane %v198, 1
    %v200 = vadd.f32 %v198, %v199
    %v201 = vmul.f32 %v200, %v191
    %v202 = vld [vmem:[%s5] sm:$0x1]
    %v203 = vadd.f32 %v201, 1e-05
    %v204 = vrsqrt.pop %v203
    %v205 = vmul.f32 %v202, %v204
    %v207 = vlaneseq
    %v208 = vshrl.u32 %v207, 7
    %v209 = vsub.s32 0, %v208
    %v210 = vrot.slane %v205, %v209
    %v212 = vmul.f32 %v193, %v210
    %v213 = vld [vmem:[%s5 + $0x1] sm:$0x1]
    %v215 = vlaneseq
    %v216 = vshrl.u32 %v215, 7
    %v217 = vsub.s32 0, %v216
    %v218 = vrot.slane %v213, %v217
    %v220 = vadd.f32 %v212, %v218
    %v221 = vmax.f32 %v220, 0.0
    %v222 = vpack.c.bf16 %v221, %v221
    %v223 = vld [vmem:[#allocation5] sm:$0xf]
    %v224 = vld [vmem:[#allocation5 + $0x4] sm:$0xf]
    %v225 = vld [vmem:[#allocation5 + $0x8] sm:$0xf]
    %v226 = vld [vmem:[#allocation5 + $0xc] sm:$0xf]
    %v227 = vld [vmem:[#allocation5 + $0x10] sm:$0xf]
    %v228 = vld [vmem:[#allocation5 + $0x14] sm:$0xf]
    %v229 = vld [vmem:[#allocation5 + $0x18] sm:$0xf]
    %v230 = vld [vmem:[#allocation5 + $0x1c] sm:$0xf]
    %v231 = vld [vmem:[#allocation5 + $0x20] sm:$0xf]
    %v232 = vld [vmem:[#allocation5 + $0x24] sm:$0xf]
    %v233 = vld [vmem:[#allocation5 + $0x28] sm:$0xf]
    %v234 = vld [vmem:[#allocation5 + $0x2c] sm:$0xf]
    %v235 = vld [vmem:[#allocation5 + $0x30] sm:$0xf]
    %v236 = vld [vmem:[#allocation5 + $0x34] sm:$0xf]
    %v237 = vld [vmem:[#allocation5 + $0x38] sm:$0xf]
    %v238 = vld [vmem:[#allocation5 + $0x3c] sm:$0xf]
    %v255 = vunpack.c.l.b16 %v223
    %v256 = vunpack.c.l.b16 %v224
    %v257 = vunpack.c.l.b16 %v225
    %v258 = vunpack.c.l.b16 %v226
    %v259 = vunpack.c.l.b16 %v227
    %v260 = vunpack.c.l.b16 %v228
    %v261 = vunpack.c.l.b16 %v229
    %v262 = vunpack.c.l.b16 %v230
    %v263 = vunpack.c.l.b16 %v231
    %v264 = vunpack.c.l.b16 %v232
    %v265 = vunpack.c.l.b16 %v233
    %v266 = vunpack.c.l.b16 %v234
    %v267 = vunpack.c.l.b16 %v235
    %v268 = vunpack.c.l.b16 %v236
    %v269 = vunpack.c.l.b16 %v237
    %v270 = vunpack.c.l.b16 %v238
    %v271 = vpack.c.b16 %v256, %v255
    %v272 = vpack.c.b16 %v258, %v257
    %v273 = vpack.c.b16 %v260, %v259
    %v274 = vpack.c.b16 %v262, %v261
    %v275 = vpack.c.b16 %v264, %v263
    %v276 = vpack.c.b16 %v266, %v265
    %v277 = vpack.c.b16 %v268, %v267
    %v278 = vpack.c.b16 %v270, %v269
    %287 = vmatprep.subr.bf16.mxu0 0
    %288 = vmatpush1.bf16.msra.mxu0 %v271
    %289 = vmatprep.subr.bf16.mxu0 0
    %290 = vmatpush1.bf16.msra.mxu0 %v272
    %291 = vmatprep.subr.bf16.mxu0 0
    %292 = vmatpush1.bf16.msra.mxu0 %v273
    %293 = vmatprep.subr.bf16.mxu0 0
    %294 = vmatpush1.bf16.msra.mxu0 %v274
    %295 = vmatprep.subr.bf16.mxu0 0
    %296 = vmatpush1.bf16.msra.mxu0 %v275
    %297 = vmatprep.subr.bf16.mxu0 0
    %298 = vmatpush1.bf16.msra.mxu0 %v276
    %299 = vmatprep.subr.bf16.mxu0 0
    %300 = vmatpush1.bf16.msra.mxu0 %v277
    %301 = vmatprep.subr.bf16.mxu0 0
    %302 = vmatpush1.bf16.msra.mxu0 %v278
    %303 = vmatprep.subr.bf16.mxu0 0
    %304 = vmatpush1.bf16.msra.mxu0 0
    %305 = vmatprep.subr.bf16.mxu0 0
    %306 = vmatpush1.bf16.msra.mxu0 0
    %307 = vmatprep.subr.bf16.mxu0 0
    %308 = vmatpush1.bf16.msra.mxu0 0
    %309 = vmatprep.subr.bf16.mxu0 0
    %310 = vmatpush1.bf16.msra.mxu0 0
    %311 = vmatprep.subr.bf16.mxu0 0
    %312 = vmatpush1.bf16.msra.mxu0 0
    %313 = vmatprep.subr.bf16.mxu0 0
    %314 = vmatpush1.bf16.msra.mxu0 0
    %315 = vmatprep.subr.bf16.mxu0 0
    %316 = vmatpush1.bf16.msra.mxu0 0
    %317 = vmatprep.subr.bf16.mxu0 0
    %318 = vmatpush1.bf16.msra.mxu0 0
    %319 = vmatprep.mubr.bf16.mxu0 0
    %320 = vmatmul.mubr.bf16.gmra.mrb[0].mxu0 %v222
    %v321 = vpop.f32.mrb[0].mxu0
    %v322 = vadd.f32 0.0, %v321
    %v323 = vpop.f32.mrb[0].mxu0
    %v324 = vpop.f32.mrb[0].mxu0
    %v325 = vpop.f32.mrb[0].mxu0
    %326 = vdwg.mxu0
    %v327 = vrot.slane %v322, 4
    %v328 = vadd.f32 %v322, %v327
    %v329 = vrot.slane %v328, 2
    %v330 = vadd.f32 %v328, %v329
    %v331 = vrot.slane %v330, 1
    %v332 = vadd.f32 %v330, %v331
    %v333 = vmul.f32 %v332, %v191
    %v334 = vsub.f32 %v322, %v333
    %v335 = vmul.f32 %v334, %v334
    %v336 = vrot.slane %v335, 4
    %v337 = vadd.f32 %v335, %v336
    %v338 = vrot.slane %v337, 2
    %v339 = vadd.f32 %v337, %v338
    %v340 = vrot.slane %v339, 1
    %v341 = vadd.f32 %v339, %v340
    %v342 = vmul.f32 %v341, %v191
    %v343 = vld [vmem:[%s5 + $0x2] sm:$0x1]
    %v344 = vadd.f32 %v342, 1e-05
    %v345 = vrsqrt.pop %v344
    %v346 = vmul.f32 %v343, %v345
    %v348 = vlaneseq
    %v349 = vshrl.u32 %v348, 7
    %v350 = vsub.s32 0, %v349
    %v351 = vrot.slane %v346, %v350
    %v353 = vmul.f32 %v334, %v351
    %v354 = vld [vmem:[%s5 + $0x3] sm:$0x1]
    %v356 = vlaneseq
    %v357 = vshrl.u32 %v356, 7
    %v358 = vsub.s32 0, %v357
    %v359 = vrot.slane %v354, %v358
    %v361 = vadd.f32 %v353, %v359
    %v362 = vmax.f32 %v361, 0.0
    %v363 = vpack.c.bf16 %v362, %v362
    %v364 = vld [vmem:[#allocation7] sm:$0xf]
    %v365 = vld [vmem:[#allocation7 + $0x4] sm:$0xf]
    %v366 = vld [vmem:[#allocation7 + $0x8] sm:$0xf]
    %v367 = vld [vmem:[#allocation7 + $0xc] sm:$0xf]
    %v368 = vld [vmem:[#allocation7 + $0x10] sm:$0xf]
    %v369 = vld [vmem:[#allocation7 + $0x14] sm:$0xf]
    %v370 = vld [vmem:[#allocation7 + $0x18] sm:$0xf]
    %v371 = vld [vmem:[#allocation7 + $0x1c] sm:$0xf]
    %v372 = vld [vmem:[#allocation7 + $0x20] sm:$0xf]
    %v373 = vld [vmem:[#allocation7 + $0x24] sm:$0xf]
    %v374 = vld [vmem:[#allocation7 + $0x28] sm:$0xf]
    %v375 = vld [vmem:[#allocation7 + $0x2c] sm:$0xf]
    %v376 = vld [vmem:[#allocation7 + $0x30] sm:$0xf]
    %v377 = vld [vmem:[#allocation7 + $0x34] sm:$0xf]
    %v378 = vld [vmem:[#allocation7 + $0x38] sm:$0xf]
    %v379 = vld [vmem:[#allocation7 + $0x3c] sm:$0xf]
    %v396 = vunpack.c.l.b16 %v364
    %v397 = vunpack.c.l.b16 %v365
    %v398 = vunpack.c.l.b16 %v366
    %v399 = vunpack.c.l.b16 %v367
    %v400 = vunpack.c.l.b16 %v368
    %v401 = vunpack.c.l.b16 %v369
    %v402 = vunpack.c.l.b16 %v370
    %v403 = vunpack.c.l.b16 %v371
    %v404 = vunpack.c.l.b16 %v372
    %v405 = vunpack.c.l.b16 %v373
    %v406 = vunpack.c.l.b16 %v374
    %v407 = vunpack.c.l.b16 %v375
    %v408 = vunpack.c.l.b16 %v376
    %v409 = vunpack.c.l.b16 %v377
    %v410 = vunpack.c.l.b16 %v378
    %v411 = vunpack.c.l.b16 %v379
    %v412 = vpack.c.b16 %v397, %v396
    %v413 = vpack.c.b16 %v399, %v398
    %v414 = vpack.c.b16 %v401, %v400
    %v415 = vpack.c.b16 %v403, %v402
    %v416 = vpack.c.b16 %v405, %v404
    %v417 = vpack.c.b16 %v407, %v406
    %v418 = vpack.c.b16 %v409, %v408
    %v419 = vpack.c.b16 %v411, %v410
    %428 = vmatprep.subr.bf16.mxu0 0
    %429 = vmatpush1.bf16.msra.mxu0 %v412
    %430 = vmatprep.subr.bf16.mxu0 0
    %431 = vmatpush1.bf16.msra.mxu0 %v413
    %432 = vmatprep.subr.bf16.mxu0 0
    %433 = vmatpush1.bf16.msra.mxu0 %v414
    %434 = vmatprep.subr.bf16.mxu0 0
    %435 = vmatpush1.bf16.msra.mxu0 %v415
    %436 = vmatprep.subr.bf16.mxu0 0
    %437 = vmatpush1.bf16.msra.mxu0 %v416
    %438 = vmatprep.subr.bf16.mxu0 0
    %439 = vmatpush1.bf16.msra.mxu0 %v417
    %440 = vmatprep.subr.bf16.mxu0 0
    %441 = vmatpush1.bf16.msra.mxu0 %v418
    %442 = vmatprep.subr.bf16.mxu0 0
    %443 = vmatpush1.bf16.msra.mxu0 %v419
    %444 = vmatprep.subr.bf16.mxu0 0
    %445 = vmatpush1.bf16.msra.mxu0 0
    %446 = vmatprep.subr.bf16.mxu0 0
    %447 = vmatpush1.bf16.msra.mxu0 0
    %448 = vmatprep.subr.bf16.mxu0 0
    %449 = vmatpush1.bf16.msra.mxu0 0
    %450 = vmatprep.subr.bf16.mxu0 0
    %451 = vmatpush1.bf16.msra.mxu0 0
    %452 = vmatprep.subr.bf16.mxu0 0
    %453 = vmatpush1.bf16.msra.mxu0 0
    %454 = vmatprep.subr.bf16.mxu0 0
    %455 = vmatpush1.bf16.msra.mxu0 0
    %456 = vmatprep.subr.bf16.mxu0 0
    %457 = vmatpush1.bf16.msra.mxu0 0
    %458 = vmatprep.subr.bf16.mxu0 0
    %459 = vmatpush1.bf16.msra.mxu0 0
    %460 = vmatprep.mubr.bf16.mxu0 0
    %461 = vmatmul.mubr.bf16.gmra.mrb[0].mxu0 %v363
    %v462 = vpop.f32.mrb[0].mxu0
    %v463 = vadd.f32 0.0, %v462
    %v464 = vpop.f32.mrb[0].mxu0
    %v465 = vpop.f32.mrb[0].mxu0
    %v466 = vpop.f32.mrb[0].mxu0
    %467 = vdwg.mxu0
    %v468 = vrot.slane %v463, 4
    %v469 = vadd.f32 %v463, %v468
    %v470 = vrot.slane %v469, 2
    %v471 = vadd.f32 %v469, %v470
    %v472 = vrot.slane %v471, 1
    %v473 = vadd.f32 %v471, %v472
    %v474 = vmul.f32 %v473, %v191
    %v475 = vsub.f32 %v463, %v474
    %v476 = vmul.f32 %v475, %v475
    %v477 = vrot.slane %v476, 4
    %v478 = vadd.f32 %v476, %v477
    %v479 = vrot.slane %v478, 2
    %v480 = vadd.f32 %v478, %v479
    %v481 = vrot.slane %v480, 1
    %v482 = vadd.f32 %v480, %v481
    %v483 = vmul.f32 %v482, %v191
    %v484 = vld [vmem:[%s5 + $0x4] sm:$0x1]
    %v485 = vadd.f32 %v483, 1e-05
    %v486 = vrsqrt.pop %v485
    %v487 = vmul.f32 %v484, %v486
    %v489 = vlaneseq
    %v490 = vshrl.u32 %v489, 7
    %v491 = vsub.s32 0, %v490
    %v492 = vrot.slane %v487, %v491
    %v494 = vmul.f32 %v475, %v492
    %v495 = vld [vmem:[%s5 + $0x5] sm:$0x1]
    %v497 = vlaneseq
    %v498 = vshrl.u32 %v497, 7
    %v499 = vsub.s32 0, %v498
    %v500 = vrot.slane %v495, %v499
    %v502 = vadd.f32 %v494, %v500
    %v503 = vmax.f32 %v502, 0.0
    %v504 = vpack.c.bf16 %v503, %v503
    %v505 = vld [vmem:[#allocation8] sm:$0xf]
    %v506 = vld [vmem:[#allocation8 + $0x4] sm:$0xf]
    %v507 = vld [vmem:[#allocation8 + $0x8] sm:$0xf]
    %v508 = vld [vmem:[#allocation8 + $0xc] sm:$0xf]
    %v509 = vld [vmem:[#allocation8 + $0x10] sm:$0xf]
    %v510 = vld [vmem:[#allocation8 + $0x14] sm:$0xf]
    %v511 = vld [vmem:[#allocation8 + $0x18] sm:$0xf]
    %v512 = vld [vmem:[#allocation8 + $0x1c] sm:$0xf]
    %v513 = vld [vmem:[#allocation8 + $0x20] sm:$0xf]
    %v514 = vld [vmem:[#allocation8 + $0x24] sm:$0xf]
    %v515 = vld [vmem:[#allocation8 + $0x28] sm:$0xf]
    %v516 = vld [vmem:[#allocation8 + $0x2c] sm:$0xf]
    %v517 = vld [vmem:[#allocation8 + $0x30] sm:$0xf]
    %v518 = vld [vmem:[#allocation8 + $0x34] sm:$0xf]
    %v519 = vld [vmem:[#allocation8 + $0x38] sm:$0xf]
    %v520 = vld [vmem:[#allocation8 + $0x3c] sm:$0xf]
    %v521 = vld [vmem:[%s5 + $0x6] sm:$0x1]
    %v523 = vlaneseq
    %v524 = vshrl.u32 %v523, 7
    %v525 = vsub.s32 0, %v524
    %v526 = vrot.slane %v521, %v525
    %v544 = vunpack.c.l.b16 %v505
    %v545 = vunpack.c.l.b16 %v506
    %v546 = vunpack.c.l.b16 %v507
    %v547 = vunpack.c.l.b16 %v508
    %v548 = vunpack.c.l.b16 %v509
    %v549 = vunpack.c.l.b16 %v510
    %v550 = vunpack.c.l.b16 %v511
    %v551 = vunpack.c.l.b16 %v512
    %v552 = vunpack.c.l.b16 %v513
    %v553 = vunpack.c.l.b16 %v514
    %v554 = vunpack.c.l.b16 %v515
    %v555 = vunpack.c.l.b16 %v516
    %v556 = vunpack.c.l.b16 %v517
    %v557 = vunpack.c.l.b16 %v518
    %v558 = vunpack.c.l.b16 %v519
    %v559 = vunpack.c.l.b16 %v520
    %v560 = vpack.c.b16 %v545, %v544
    %v561 = vpack.c.b16 %v547, %v546
    %v562 = vpack.c.b16 %v549, %v548
    %v563 = vpack.c.b16 %v551, %v550
    %v564 = vpack.c.b16 %v553, %v552
    %v565 = vpack.c.b16 %v555, %v554
    %v566 = vpack.c.b16 %v557, %v556
    %v567 = vpack.c.b16 %v559, %v558
    %576 = vmatprep.subr.bf16.mxu0 0
    %577 = vmatpush1.bf16.msra.mxu0 %v560
    %578 = vmatprep.subr.bf16.mxu0 0
    %579 = vmatpush1.bf16.msra.mxu0 %v561
    %580 = vmatprep.subr.bf16.mxu0 0
    %581 = vmatpush1.bf16.msra.mxu0 %v562
    %582 = vmatprep.subr.bf16.mxu0 0
    %583 = vmatpush1.bf16.msra.mxu0 %v563
    %584 = vmatprep.subr.bf16.mxu0 0
    %585 = vmatpush1.bf16.msra.mxu0 %v564
    %586 = vmatprep.subr.bf16.mxu0 0
    %587 = vmatpush1.bf16.msra.mxu0 %v565
    %588 = vmatprep.subr.bf16.mxu0 0
    %589 = vmatpush1.bf16.msra.mxu0 %v566
    %590 = vmatprep.subr.bf16.mxu0 0
    %591 = vmatpush1.bf16.msra.mxu0 %v567
    %592 = vmatprep.subr.bf16.mxu0 0
    %593 = vmatpush1.bf16.msra.mxu0 0
    %594 = vmatprep.subr.bf16.mxu0 0
    %595 = vmatpush1.bf16.msra.mxu0 0
    %596 = vmatprep.subr.bf16.mxu0 0
    %597 = vmatpush1.bf16.msra.mxu0 0
    %598 = vmatprep.subr.bf16.mxu0 0
    %599 = vmatpush1.bf16.msra.mxu0 0
    %600 = vmatprep.subr.bf16.mxu0 0
    %601 = vmatpush1.bf16.msra.mxu0 0
    %602 = vmatprep.subr.bf16.mxu0 0
    %603 = vmatpush1.bf16.msra.mxu0 0
    %604 = vmatprep.subr.bf16.mxu0 0
    %605 = vmatpush1.bf16.msra.mxu0 0
    %606 = vmatprep.subr.bf16.mxu0 0
    %607 = vmatpush1.bf16.msra.mxu0 0
    %608 = vmatprep.mubr.bf16.mxu0 0
    %609 = vmatmul.mubr.bf16.gmra.mrb[0].mxu0 %v504
    %v610 = vpop.f32.mrb[0].mxu0
    %v611 = vadd.f32 %v526, %v610
    %v612 = vpop.f32.mrb[0].mxu0
    %v613 = vpop.f32.mrb[0].mxu0
    %v614 = vpop.f32.mrb[0].mxu0
    %615 = vdwg.mxu0
    %616 = vst [vmem:[#allocation10] sm:$0xff] %v611
    // Predicated region
    $region42: #{protein_structure_predictor.1} parent=1 // pred_check
      _
    $region43: #{protein_structure_predictor.1} parent=1 // pred_check_branch
      %618 = sbr.rel (0) target = $region45
    $region44: #{protein_structure_predictor.1} parent=1 // pred_region
      %s620 = ssub.s32 128, 128
      %621 = vsyncadd [#allocation4], %s620
      %s623 = sshll.u32 [#allocation10], 4
      %s624 = int_to_ptr.vmem [resolvable:$true] %s623
      %626 = dma.vmem_to_hbm [thread:$0]  %s624, 128, %s6, [#allocation4]
    $region45: #{protein_structure_predictor.1} parent=1 // pred_fallthru
      _
    // Predicated region
    $region46: #{protein_structure_predictor.1} parent=1 // pred_check
      _
    $region47: #{protein_structure_predictor.1} parent=1 // pred_check_branch
      %628 = sbr.rel (0) target = $region49
    $region48: #{protein_structure_predictor.1} parent=1 // pred_region
      %629 = dma.done [#allocation4], 128
    $region49: #{protein_structure_predictor.1} parent=1 // pred_fallthru
      _
    %630 = vsyncpa [#allocation3], 1
    %631 = vsyncpa [#allocation6], 1
    %632 = vsyncpa [#allocation9], 1
    %633 = vsyncpa [#allocation4], 1

</llo_original>
